<compile_context>
chip_gen: v6e
topology: v6e:2x2x1
jax: 0.10.0
libtpu: 0.0.40
codegen_flags: <defaults>
</compile_context>

<pallas_src>
import functools

import jax
import jax.numpy as jnp
from jax.experimental import pallas as pl
from jax.experimental.pallas import tpu as pltpu

_NEG_BIG = 1e30  # large finite negative bias instead of -inf (avoids NaN rows)


def _attn_body(q, k, v, bias, num_heads, head_dim):
    """q: (Lt, H*D), k/v: (S, H*D), bias: (1, S) f32 or None -> (Lt, H*D) f32."""
    scale = jnp.asarray(1.0 / (head_dim ** 0.5), q.dtype)
    outs = []
    for h in range(num_heads):                       # static, small (nhead=4)
        sl = slice(h * head_dim, (h + 1) * head_dim)
        qh = q[:, sl] * scale                        # (Lt, D), scale folded into q
        kh = k[:, sl]                                # (S, D)
        vh = v[:, sl]                                # (S, D)
        # MXU matmul in the native input dtype, f32 accumulation.
        s = jnp.dot(qh, kh.T, preferred_element_type=jnp.float32)   # (Lt, S)
        if bias is not None:
            s = s + bias                             # lane-broadcast additive mask
        m = jnp.max(s, axis=-1, keepdims=True)
        p = jnp.exp(s - m)
        l = jnp.sum(p, axis=-1, keepdims=True)
        p = p * pl.reciprocal(l, approx=True)        # divide moved to EUP
        outs.append(jnp.dot(p.astype(vh.dtype), vh,
                            preferred_element_type=jnp.float32))    # (Lt, D)
    return jnp.concatenate(outs, axis=-1)            # (Lt, H*D), lane-dense


def _attn_kernel(q_ref, k_ref, v_ref, o_ref, *, num_heads, head_dim):
    # q_ref: (1, Lt, H*D); k_ref/v_ref: (1, S, H*D); o_ref: (1, Lt, H*D)
    o = _attn_body(q_ref[0], k_ref[0], v_ref[0], None, num_heads, head_dim)
    o_ref[0] = o.astype(o_ref.dtype)


def _attn_kernel_masked(qm_ref, km_ref, q_ref, k_ref, v_ref, o_ref, *,
                        num_heads, head_dim):
    # qm_ref: (1, Lt, 1) f32 {0,1}; km_ref: (1, 1, S) f32 {0,1}
    bias = (km_ref[0] - 1.0) * _NEG_BIG              # (1, S): 0 valid, -1e30 masked
    o = _attn_body(q_ref[0], k_ref[0], v_ref[0], bias, num_heads, head_dim)
    # TODO(synk): reference produces NaN for fully-masked query rows (and rows
    # with every kv position masked); here masked query rows are zeroed instead.
    o = o * qm_ref[0]                                # (Lt, 1) broadcast
    o_ref[0] = o.astype(o_ref.dtype)


def _pick_l_tile(L):
    for t in (256, 128):
        if L % t == 0:
            return t
    return L


def full_attention(queries, keys, values, q_mask=None, kv_mask=None):
    """queries [N,L,H,D], keys/values [N,S,H,D], masks [N,L]/[N,S] -> [N,L,H,D]."""
    N, L, H, D = queries.shape
    S = keys.shape[1]
    HD = H * D

    # Free reshapes of the trailing contiguous dims -> lane-dense (seq, H*D)
    # slabs; no HBM transpose passes.
    qf = queries.reshape(N, L, HD)
    kf = keys.reshape(N, S, HD)
    vf = values.reshape(N, S, HD)

    lt = _pick_l_tile(L)
    grid = (N, L // lt)

    qkv_specs = [
        pl.BlockSpec((1, lt, HD), lambda n, i: (n, i, 0)),
        pl.BlockSpec((1, S, HD), lambda n, i: (n, 0, 0)),   # K resident across L tiles
        pl.BlockSpec((1, S, HD), lambda n, i: (n, 0, 0)),   # V resident across L tiles
    ]
    out_spec = pl.BlockSpec((1, lt, HD), lambda n, i: (n, i, 0))
    out_shape = jax.ShapeDtypeStruct((N, L, HD), queries.dtype)
    cp = pltpu.CompilerParams(
        dimension_semantics=("parallel", "parallel"),
        vmem_limit_bytes=48 * 1024 * 1024,
    )

    if kv_mask is None:
        kern = functools.partial(_attn_kernel, num_heads=H, head_dim=D)
        out = pl.pallas_call(
            kern,
            out_shape=out_shape,
            grid=grid,
            in_specs=qkv_specs,
            out_specs=out_spec,
            compiler_params=cp,
        )(qf, kf, vf)
    else:
        if q_mask is None:
            q_mask = jnp.ones((N, L), dtype=bool)
        qm = q_mask.astype(jnp.float32).reshape(N, L, 1)
        km = kv_mask.astype(jnp.float32).reshape(N, 1, S)
        mask_specs = [
            pl.BlockSpec((1, lt, 1), lambda n, i: (n, i, 0)),
            pl.BlockSpec((1, 1, S), lambda n, i: (n, 0, 0)),
        ]
        kern = functools.partial(_attn_kernel_masked, num_heads=H, head_dim=D)
        out = pl.pallas_call(
            kern,
            out_shape=out_shape,
            grid=grid,
            in_specs=mask_specs + qkv_specs,
            out_specs=out_spec,
            compiler_params=cp,
        )(qm, km, qf, kf, vf)

    return out.reshape(N, L, H, D)


def _reference_attention(q, k, v, q_mask=None, kv_mask=None):
    QK = jnp.einsum('nlhd,nshd->nlsh', q, k)
    if kv_mask is not None:
        m = (q_mask[:, :, None, None] & kv_mask[:, None, :, None])
        QK = jnp.where(m, QK, -jnp.inf)
    temp = 1.0 / q.shape[3] ** 0.5
    A = jax.nn.softmax(temp * QK, axis=2)
    return jnp.einsum('nlsh,nshd->nlhd', A, v)


if __name__ == "__main__":
    N, L, S, H, D = 2, 16, 16, 4, 32
    key = jax.random.PRNGKey(0)
    kq, kk, kv = jax.random.split(key, 3)
    queries = jax.random.normal(kq, (N, L, H, D), dtype=jnp.float32)
    keys = jax.random.normal(kk, (N, S, H, D), dtype=jnp.float32)
    values = jax.random.normal(kv, (N, S, H, D), dtype=jnp.float32)

    # --- unmasked path ---
    out = full_attention(queries, keys, values)
    out = jax.block_until_ready(out)
    ref = _reference_attention(queries, keys, values)
    assert out.shape == (N, L, H, D)
    assert jnp.allclose(out, ref, atol=2e-3, rtol=2e-3), "unmasked mismatch"

    # --- masked path (q_mask all valid, last 4 kv positions of batch 1 masked) ---
    q_mask = jnp.ones((N, L), dtype=bool)
    kv_mask = jnp.ones((N, S), dtype=bool).at[1, S - 4:].set(False)
    out_m = full_attention(queries, keys, values, q_mask=q_mask, kv_mask=kv_mask)
    out_m = jax.block_until_ready(out_m)
    ref_m = _reference_attention(queries, keys, values, q_mask=q_mask, kv_mask=kv_mask)
    assert jnp.allclose(out_m, ref_m, atol=2e-3, rtol=2e-3), "masked mismatch"

    print("KERNEL_OK")
</pallas_src>

<mosaic_0001>
module attributes {stable_mosaic.version = 11 : i64} {
  func.func @_attn_kernel(%arg0: i32, %arg1: i32, %arg2: memref<1x16x128xf32, #tpu.memory_space<vmem>>, %arg3: memref<1x16x128xf32, #tpu.memory_space<vmem>>, %arg4: memref<1x16x128xf32, #tpu.memory_space<vmem>>, %arg5: memref<1x16x128xf32, #tpu.memory_space<vmem>>) attributes {dimension_semantics = [#tpu.dimension_semantics<parallel>, #tpu.dimension_semantics<parallel>], iteration_bounds = array<i64: 2, 1>, scalar_prefetch = 0 : i64, scratch_operands = 0 : i64, tpu.core_type = #tpu.core_type<tc>, window_params = [{transform_indices = @transform_0, window_bounds = array<i64: 1, 16, 128>}, {transform_indices = @transform_1, window_bounds = array<i64: 1, 16, 128>}, {transform_indices = @transform_2, window_bounds = array<i64: 1, 16, 128>}, {transform_indices = @transform_3, window_bounds = array<i64: 1, 16, 128>}]} {
    %c0 = arith.constant 0 : index
    %c0_0 = arith.constant 0 : index
    %c0_1 = arith.constant 0 : index
    %0 = vector.load %arg2[%c0, %c0_0, %c0_1] : memref<1x16x128xf32, #tpu.memory_space<vmem>>, vector<1x16x128xf32>
    %1 = vector.shape_cast %0 : vector<1x16x128xf32> to vector<16x128xf32>
    %c0_2 = arith.constant 0 : index
    %c0_3 = arith.constant 0 : index
    %c0_4 = arith.constant 0 : index
    %2 = vector.load %arg3[%c0_2, %c0_3, %c0_4] : memref<1x16x128xf32, #tpu.memory_space<vmem>>, vector<1x16x128xf32>
    %3 = vector.shape_cast %2 : vector<1x16x128xf32> to vector<16x128xf32>
    %c0_5 = arith.constant 0 : index
    %c0_6 = arith.constant 0 : index
    %c0_7 = arith.constant 0 : index
    %4 = vector.load %arg4[%c0_5, %c0_6, %c0_7] : memref<1x16x128xf32, #tpu.memory_space<vmem>>, vector<1x16x128xf32>
    %5 = vector.shape_cast %4 : vector<1x16x128xf32> to vector<16x128xf32>
    %6 = vector.extract_strided_slice %1 {offsets = [0, 0], sizes = [16, 32], strides = [1, 1]} : vector<16x128xf32> to vector<16x32xf32>
    %cst = arith.constant 0.176776692 : f32
    %7 = vector.broadcast %cst : f32 to vector<16x32xf32>
    %8 = arith.mulf %6, %7 : vector<16x32xf32>
    %9 = vector.extract_strided_slice %3 {offsets = [0, 0], sizes = [16, 32], strides = [1, 1]} : vector<16x128xf32> to vector<16x32xf32>
    %10 = vector.extract_strided_slice %5 {offsets = [0, 0], sizes = [16, 32], strides = [1, 1]} : vector<16x128xf32> to vector<16x32xf32>
    %11 = tpu.transpose %9, [1, 0] : vector<16x32xf32> -> vector<32x16xf32>
    %cst_8 = arith.constant dense<0.000000e+00> : vector<16x16xf32>
    %12 = tpu.matmul %8, %11, %cst_8 {dimension_numbers = #tpu.dot_dimension_numbers<[1], [0], [0], [1], [0, 0, 1, 1], [], []>} : vector<16x32xf32>, vector<32x16xf32>, vector<16x16xf32> -> vector<16x16xf32>
    %cst_9 = arith.constant dense<0xFF800000> : vector<16xf32>
    %13 = vector.multi_reduction <maximumf>, %12, %cst_9 [1] : vector<16x16xf32> to vector<16xf32>
    %14 = vector.shape_cast %13 : vector<16xf32> to vector<16x1xf32>
    %15 = vector.broadcast %14 : vector<16x1xf32> to vector<16x16xf32>
    %16 = arith.subf %12, %15 : vector<16x16xf32>
    %17 = math.exp %16 : vector<16x16xf32>
    %cst_10 = arith.constant dense<0.000000e+00> : vector<16xf32>
    %18 = vector.multi_reduction <add>, %17, %cst_10 [1] : vector<16x16xf32> to vector<16xf32>
    %19 = vector.shape_cast %18 : vector<16xf32> to vector<16x1xf32>
    %20 = tpu.reciprocal %19 {approx = true} : vector<16x1xf32> -> vector<16x1xf32>
    %21 = vector.broadcast %20 : vector<16x1xf32> to vector<16x16xf32>
    %22 = arith.mulf %17, %21 : vector<16x16xf32>
    %cst_11 = arith.constant dense<0.000000e+00> : vector<16x32xf32>
    %23 = tpu.matmul %22, %10, %cst_11 {dimension_numbers = #tpu.dot_dimension_numbers<[1], [0], [0], [1], [0, 0, 1, 1], [], []>} : vector<16x16xf32>, vector<16x32xf32>, vector<16x32xf32> -> vector<16x32xf32>
    %24 = vector.extract_strided_slice %1 {offsets = [0, 32], sizes = [16, 32], strides = [1, 1]} : vector<16x128xf32> to vector<16x32xf32>
    %cst_12 = arith.constant 0.176776692 : f32
    %25 = vector.broadcast %cst_12 : f32 to vector<16x32xf32>
    %26 = arith.mulf %24, %25 : vector<16x32xf32>
    %27 = vector.extract_strided_slice %3 {offsets = [0, 32], sizes = [16, 32], strides = [1, 1]} : vector<16x128xf32> to vector<16x32xf32>
    %28 = vector.extract_strided_slice %5 {offsets = [0, 32], sizes = [16, 32], strides = [1, 1]} : vector<16x128xf32> to vector<16x32xf32>
    %29 = tpu.transpose %27, [1, 0] : vector<16x32xf32> -> vector<32x16xf32>
    %cst_13 = arith.constant dense<0.000000e+00> : vector<16x16xf32>
    %30 = tpu.matmul %26, %29, %cst_13 {dimension_numbers = #tpu.dot_dimension_numbers<[1], [0], [0], [1], [0, 0, 1, 1], [], []>} : vector<16x32xf32>, vector<32x16xf32>, vector<16x16xf32> -> vector<16x16xf32>
    %cst_14 = arith.constant dense<0xFF800000> : vector<16xf32>
    %31 = vector.multi_reduction <maximumf>, %30, %cst_14 [1] : vector<16x16xf32> to vector<16xf32>
    %32 = vector.shape_cast %31 : vector<16xf32> to vector<16x1xf32>
    %33 = vector.broadcast %32 : vector<16x1xf32> to vector<16x16xf32>
    %34 = arith.subf %30, %33 : vector<16x16xf32>
    %35 = math.exp %34 : vector<16x16xf32>
    %cst_15 = arith.constant dense<0.000000e+00> : vector<16xf32>
    %36 = vector.multi_reduction <add>, %35, %cst_15 [1] : vector<16x16xf32> to vector<16xf32>
    %37 = vector.shape_cast %36 : vector<16xf32> to vector<16x1xf32>
    %38 = tpu.reciprocal %37 {approx = true} : vector<16x1xf32> -> vector<16x1xf32>
    %39 = vector.broadcast %38 : vector<16x1xf32> to vector<16x16xf32>
    %40 = arith.mulf %35, %39 : vector<16x16xf32>
    %cst_16 = arith.constant dense<0.000000e+00> : vector<16x32xf32>
    %41 = tpu.matmul %40, %28, %cst_16 {dimension_numbers = #tpu.dot_dimension_numbers<[1], [0], [0], [1], [0, 0, 1, 1], [], []>} : vector<16x16xf32>, vector<16x32xf32>, vector<16x32xf32> -> vector<16x32xf32>
    %42 = vector.extract_strided_slice %1 {offsets = [0, 64], sizes = [16, 32], strides = [1, 1]} : vector<16x128xf32> to vector<16x32xf32>
    %cst_17 = arith.constant 0.176776692 : f32
    %43 = vector.broadcast %cst_17 : f32 to vector<16x32xf32>
    %44 = arith.mulf %42, %43 : vector<16x32xf32>
    %45 = vector.extract_strided_slice %3 {offsets = [0, 64], sizes = [16, 32], strides = [1, 1]} : vector<16x128xf32> to vector<16x32xf32>
    %46 = vector.extract_strided_slice %5 {offsets = [0, 64], sizes = [16, 32], strides = [1, 1]} : vector<16x128xf32> to vector<16x32xf32>
    %47 = tpu.transpose %45, [1, 0] : vector<16x32xf32> -> vector<32x16xf32>
    %cst_18 = arith.constant dense<0.000000e+00> : vector<16x16xf32>
    %48 = tpu.matmul %44, %47, %cst_18 {dimension_numbers = #tpu.dot_dimension_numbers<[1], [0], [0], [1], [0, 0, 1, 1], [], []>} : vector<16x32xf32>, vector<32x16xf32>, vector<16x16xf32> -> vector<16x16xf32>
    %cst_19 = arith.constant dense<0xFF800000> : vector<16xf32>
    %49 = vector.multi_reduction <maximumf>, %48, %cst_19 [1] : vector<16x16xf32> to vector<16xf32>
    %50 = vector.shape_cast %49 : vector<16xf32> to vector<16x1xf32>
    %51 = vector.broadcast %50 : vector<16x1xf32> to vector<16x16xf32>
    %52 = arith.subf %48, %51 : vector<16x16xf32>
    %53 = math.exp %52 : vector<16x16xf32>
    %cst_20 = arith.constant dense<0.000000e+00> : vector<16xf32>
    %54 = vector.multi_reduction <add>, %53, %cst_20 [1] : vector<16x16xf32> to vector<16xf32>
    %55 = vector.shape_cast %54 : vector<16xf32> to vector<16x1xf32>
    %56 = tpu.reciprocal %55 {approx = true} : vector<16x1xf32> -> vector<16x1xf32>
    %57 = vector.broadcast %56 : vector<16x1xf32> to vector<16x16xf32>
    %58 = arith.mulf %53, %57 : vector<16x16xf32>
    %cst_21 = arith.constant dense<0.000000e+00> : vector<16x32xf32>
    %59 = tpu.matmul %58, %46, %cst_21 {dimension_numbers = #tpu.dot_dimension_numbers<[1], [0], [0], [1], [0, 0, 1, 1], [], []>} : vector<16x16xf32>, vector<16x32xf32>, vector<16x32xf32> -> vector<16x32xf32>
    %60 = vector.extract_strided_slice %1 {offsets = [0, 96], sizes = [16, 32], strides = [1, 1]} : vector<16x128xf32> to vector<16x32xf32>
    %cst_22 = arith.constant 0.176776692 : f32
    %61 = vector.broadcast %cst_22 : f32 to vector<16x32xf32>
    %62 = arith.mulf %60, %61 : vector<16x32xf32>
    %63 = vector.extract_strided_slice %3 {offsets = [0, 96], sizes = [16, 32], strides = [1, 1]} : vector<16x128xf32> to vector<16x32xf32>
    %64 = vector.extract_strided_slice %5 {offsets = [0, 96], sizes = [16, 32], strides = [1, 1]} : vector<16x128xf32> to vector<16x32xf32>
    %65 = tpu.transpose %63, [1, 0] : vector<16x32xf32> -> vector<32x16xf32>
    %cst_23 = arith.constant dense<0.000000e+00> : vector<16x16xf32>
    %66 = tpu.matmul %62, %65, %cst_23 {dimension_numbers = #tpu.dot_dimension_numbers<[1], [0], [0], [1], [0, 0, 1, 1], [], []>} : vector<16x32xf32>, vector<32x16xf32>, vector<16x16xf32> -> vector<16x16xf32>
    %cst_24 = arith.constant dense<0xFF800000> : vector<16xf32>
    %67 = vector.multi_reduction <maximumf>, %66, %cst_24 [1] : vector<16x16xf32> to vector<16xf32>
    %68 = vector.shape_cast %67 : vector<16xf32> to vector<16x1xf32>
    %69 = vector.broadcast %68 : vector<16x1xf32> to vector<16x16xf32>
    %70 = arith.subf %66, %69 : vector<16x16xf32>
    %71 = math.exp %70 : vector<16x16xf32>
    %cst_25 = arith.constant dense<0.000000e+00> : vector<16xf32>
    %72 = vector.multi_reduction <add>, %71, %cst_25 [1] : vector<16x16xf32> to vector<16xf32>
    %73 = vector.shape_cast %72 : vector<16xf32> to vector<16x1xf32>
    %74 = tpu.reciprocal %73 {approx = true} : vector<16x1xf32> -> vector<16x1xf32>
    %75 = vector.broadcast %74 : vector<16x1xf32> to vector<16x16xf32>
    %76 = arith.mulf %71, %75 : vector<16x16xf32>
    %cst_26 = arith.constant dense<0.000000e+00> : vector<16x32xf32>
    %77 = tpu.matmul %76, %64, %cst_26 {dimension_numbers = #tpu.dot_dimension_numbers<[1], [0], [0], [1], [0, 0, 1, 1], [], []>} : vector<16x16xf32>, vector<16x32xf32>, vector<16x32xf32> -> vector<16x32xf32>
    %78 = tpu.concatenate %23, %41, %59, %77 in 1 : vector<16x32xf32>, vector<16x32xf32>, vector<16x32xf32>, vector<16x32xf32> -> vector<16x128xf32>
    %c0_27 = arith.constant 0 : index
    %c0_28 = arith.constant 0 : index
    %c0_29 = arith.constant 0 : index
    %79 = vector.load %arg5[%c0_27, %c0_28, %c0_29] : memref<1x16x128xf32, #tpu.memory_space<vmem>>, vector<1x16x128xf32>
    %80 = vector.shape_cast %79 : vector<1x16x128xf32> to vector<16x128xf32>
    %81 = vector.shape_cast %78 : vector<16x128xf32> to vector<1x16x128xf32>
    tpu.vector_store %arg5[%c0_27, %c0_28, %c0_29], %81 {strides = array<i32>} : memref<1x16x128xf32, #tpu.memory_space<vmem>>, vector<1x16x128xf32>,
    return
  }
  func.func @transform_0(%arg0: i32, %arg1: i32) -> (i32, i32, i32) {
    %c0_i32 = arith.constant 0 : i32
    %c0_i32_0 = arith.constant 0 : i32
    return %arg0, %arg1, %c0_i32 : i32, i32, i32
  }
  func.func @transform_1(%arg0: i32, %arg1: i32) -> (i32, i32, i32) {
    %c0_i32 = arith.constant 0 : i32
    %c0_i32_0 = arith.constant 0 : i32
    %c0_i32_1 = arith.constant 0 : i32
    return %arg0, %c0_i32, %c0_i32_0 : i32, i32, i32
  }
  func.func @transform_2(%arg0: i32, %arg1: i32) -> (i32, i32, i32) {
    %c0_i32 = arith.constant 0 : i32
    %c0_i32_0 = arith.constant 0 : i32
    %c0_i32_1 = arith.constant 0 : i32
    return %arg0, %c0_i32, %c0_i32_0 : i32, i32, i32
  }
  func.func @transform_3(%arg0: i32, %arg1: i32) -> (i32, i32, i32) {
    %c0_i32 = arith.constant 0 : i32
    %c0_i32_0 = arith.constant 0 : i32
    return %arg0, %arg1, %c0_i32 : i32, i32, i32
  }
}

</mosaic_0001>

<llo_original>
// kernel: tpu_custom_call.1
$region0: #{tpu_custom_call.1}
  #allocation0 [shape = 'u32[]', space=smem, size = 0x4, offset = 0x4, fixed_abs, tag = 'smem constant byte address 0x4 - core index']
  #allocation1 [shape = 'u32[144,128]{1,0:T(1,128)}', space=vmem, size = 0x12000, scoped, tag = 'internal scratch']
  %s0 = inlined_call_operand.hbm [shape: f32[2,16,128], index: 0, kind: input, shape index: {}]
  %s1 = inlined_call_operand.hbm [shape: f32[2,16,128], index: 1, kind: input, shape index: {}]
  %s2 = inlined_call_operand.hbm [shape: f32[2,16,128], index: 2, kind: input, shape index: {}]
  %s3 = inlined_call_operand.hbm [shape: f32[2,16,128], index: 3, kind: output, shape index: {}]
  %s4 = sld [smem:[#allocation0]]
  $region57: #{tpu_custom_call.1} parent=0
    _
  %s6 = ssub.s32 1, %s4
  %s7 = scalar_select 0, %s6, %s4
  $region1: #{tpu_custom_call.1} parent=0
    #allocation2 [shape = 'u8[16384]{0}', space=vmem, size = 0x4000, scoped, tag = 'input window, operand 0']
    #allocation3 [shape = 's32[2]{0}', space=sflag, size = 0x8, scoped, tag = 'scoped memory for tpu_custom_call.1']
    #allocation4 [shape = 's32[2]{0}', space=sflag, size = 0x8, scoped, tag = 'scoped memory for tpu_custom_call.1']
    #allocation5 [shape = 'u8[16384]{0}', space=vmem, size = 0x4000, scoped, tag = 'input window, operand 1']
    #allocation6 [shape = 's32[2]{0}', space=sflag, size = 0x8, scoped, tag = 'scoped memory for tpu_custom_call.1']
    #allocation7 [shape = 'u8[16384]{0}', space=vmem, size = 0x4000, scoped, tag = 'input window, operand 2']
    #allocation8 [shape = 'u8[16384]{0}', space=vmem, size = 0x4000, scoped, tag = 'output window, operand 0']
    %8 = vsyncpa [#allocation3], 0
    %s9 = scalar_lea.sflag [#allocation3], 1
    %10 = vsyncpa %s9, 0
    %11 = vsyncpa [#allocation6], 0
    %s12 = scalar_lea.sflag [#allocation6], 1
    %13 = vsyncpa %s12, 0
    %14 = vsyncpa [#allocation4], 0
    %s15 = scalar_lea.sflag [#allocation4], 1
    %16 = vsyncpa %s15, 0
    loop: start=0, step=1, limit=4
    $region2: #{tpu_custom_call.1} parent=1 // loop_pre_header
      _
    $region3: #{tpu_custom_call.1} parent=1 // loop_header
      %s18 = sphi 0, %s22
      %p19 = scmp.ge.s32.totalorder %s18, 4
      %s25 = sphi 0, %s37
      %s26 = sphi 0, %s33
      %s27 = sphi 0, %s25
      %s28 = sphi 0, %s26
      %s29 = sphi 0, %s27
      %s30 = sphi 0, %s28
      %s42 = sphi 0, %s44
      %s45 = sphi 0, %s42
      %s46 = sphi 0, %s45
      %s62 = sphi 0, %s46
      %s68 = sphi 0, %s70
      %s71 = sphi 0, %s68
      %s72 = sphi 0, %s71
      %s88 = sphi 0, %s72
      %s94 = sphi 0, %s96
      %s97 = sphi 0, %s94
      %s98 = sphi 0, %s97
      %s114 = sphi 0, %s98
      %s122 = sphi 0, %s124
      %s125 = sphi 0, %s122
      %s126 = sphi 0, %s125
      %s142 = sphi 0, %s126
    $region4: #{tpu_custom_call.1} parent=1 // loop_header_branch
      %21 = sbr.rel (%p19) target = $region8
    $region5: #{tpu_custom_call.1} parent=1 // loop_body
      %s23 = ssub.s32 %s18, 1
      %s24 = ssub.s32 %s18, 2
      %s31 = sadd.s32 1, %s26
      %p32 = scmp.ge.s32.totalorder %s31, 1
      %s33 = scalar_select %p32, 0, %s31
      %s34 = sadd.s32 1, %s25
      %s35 = scalar_select %p32, %s34, %s25
      %p36 = scmp.ge.s32.totalorder %s35, 2
      %s37 = scalar_select %p36, 0, %s35
      %s38 = ssub.s32 %s25, %s37
      %s39 = ssub.s32 %s26, %s33
      %s40 = sor.u32 %s38, %s39
      %p41 = scmp.eq.s32.totalorder %s40, 0
      %s43 = sadd.s32 %s42, 1
      %s44 = scalar_select %p41, %s42, %s43
      %p47 = pneg %p41
      %p48 = scmp.eq.s32.totalorder %s18, 1
      %p49 = por %p47, %p48
      %p50 = scmp.ne.s32.totalorder %s42, %s45
      %p51 = scmp.eq.s32.totalorder %s18, 0
      %p52 = por %p50, %p51
      %p53 = scmp.ne.s32.totalorder %s42, %s45
      %p54 = scmp.eq.s32.totalorder %s23, 1
      %p55 = por %p53, %p54
      %p56 = scmp.ne.s32.totalorder %s45, %s46
      %p57 = scmp.eq.s32.totalorder %s23, 0
      %p58 = por %p56, %p57
      %p59 = scmp.ne.s32.totalorder %s45, %s46
      %p60 = scmp.eq.s32.totalorder %s24, 1
      %p61 = por %p59, %p60
      %p63 = scmp.ne.s32.totalorder %s46, %s62
      %p64 = scmp.eq.s32.totalorder %s24, 0
      %p65 = por %p63, %p64
      %s66 = ssub.s32 %s25, %s37
      %p67 = scmp.eq.s32.totalorder %s66, 0
      %s69 = sadd.s32 %s68, 1
      %s70 = scalar_select %p67, %s68, %s69
      %p73 = pneg %p67
      %p74 = scmp.eq.s32.totalorder %s18, 1
      %p75 = por %p73, %p74
      %p76 = scmp.ne.s32.totalorder %s68, %s71
      %p77 = scmp.eq.s32.totalorder %s18, 0
      %p78 = por %p76, %p77
      %p79 = scmp.ne.s32.totalorder %s68, %s71
      %p80 = scmp.eq.s32.totalorder %s23, 1
      %p81 = por %p79, %p80
      %p82 = scmp.ne.s32.totalorder %s71, %s72
      %p83 = scmp.eq.s32.totalorder %s23, 0
      %p84 = por %p82, %p83
      %p85 = scmp.ne.s32.totalorder %s71, %s72
      %p86 = scmp.eq.s32.totalorder %s24, 1
      %p87 = por %p85, %p86
      %p89 = scmp.ne.s32.totalorder %s72, %s88
      %p90 = scmp.eq.s32.totalorder %s24, 0
      %p91 = por %p89, %p90
      %s92 = ssub.s32 %s25, %s37
      %p93 = scmp.eq.s32.totalorder %s92, 0
      %s95 = sadd.s32 %s94, 1
      %s96 = scalar_select %p93, %s94, %s95
      %p99 = pneg %p93
      %p100 = scmp.eq.s32.totalorder %s18, 1
      %p101 = por %p99, %p100
      %p102 = scmp.ne.s32.totalorder %s94, %s97
      %p103 = scmp.eq.s32.totalorder %s18, 0
      %p104 = por %p102, %p103
      %p105 = scmp.ne.s32.totalorder %s94, %s97
      %p106 = scmp.eq.s32.totalorder %s23, 1
      %p107 = por %p105, %p106
      %p108 = scmp.ne.s32.totalorder %s97, %s98
      %p109 = scmp.eq.s32.totalorder %s23, 0
      %p110 = por %p108, %p109
      %p111 = scmp.ne.s32.totalorder %s97, %s98
      %p112 = scmp.eq.s32.totalorder %s24, 1
      %p113 = por %p111, %p112
      %p115 = scmp.ne.s32.totalorder %s98, %s114
      %p116 = scmp.eq.s32.totalorder %s24, 0
      %p117 = por %p115, %p116
      %s118 = ssub.s32 %s25, %s37
      %s119 = ssub.s32 %s26, %s33
      %s120 = sor.u32 %s118, %s119
      %p121 = scmp.eq.s32.totalorder %s120, 0
      %s123 = sadd.s32 %s122, 1
      %s124 = scalar_select %p121, %s122, %s123
      %p127 = pneg %p121
      %p128 = scmp.eq.s32.totalorder %s18, 1
      %p129 = por %p127, %p128
      %p130 = scmp.ne.s32.totalorder %s122, %s125
      %p131 = scmp.eq.s32.totalorder %s18, 0
      %p132 = por %p130, %p131
      %p133 = scmp.ne.s32.totalorder %s122, %s125
      %p134 = scmp.eq.s32.totalorder %s23, 1
      %p135 = por %p133, %p134
      %p136 = scmp.ne.s32.totalorder %s125, %s126
      %p137 = scmp.eq.s32.totalorder %s23, 0
      %p138 = por %p136, %p137
      %p139 = scmp.ne.s32.totalorder %s125, %s126
      %p140 = scmp.eq.s32.totalorder %s24, 1
      %p141 = por %p139, %p140
      %p143 = scmp.ne.s32.totalorder %s126, %s142
      %p144 = scmp.eq.s32.totalorder %s24, 0
      %p145 = por %p143, %p144
      %p146 = scmp.le.s32.totalorder 1, %s18
      %p147 = scmp.lt.s32.totalorder %s18, 3
      %p148 = pnand %p146, %p147
      %p149 = pneg %p148
      // Predicated region
      $region9: #{tpu_custom_call.1} parent=5 // pred_check
        _
      $region10: #{tpu_custom_call.1} parent=5 // pred_check_branch
        %151 = sbr.rel (%p148) target = $region12
      $region11: #{tpu_custom_call.1} parent=5 // pred_region
        %s152 = ssub.s32 %s18, 1
      $region12: #{tpu_custom_call.1} parent=5 // pred_fallthru
        _
      %p153 = scmp.lt.s32.totalorder %s18, 2
      // Predicated region
      $region13: #{tpu_custom_call.1} parent=5 // pred_check
        %p154 = pneg %p153
      $region14: #{tpu_custom_call.1} parent=5 // pred_check_branch
        %156 = sbr.rel (%p154) target = $region16
      $region15: #{tpu_custom_call.1} parent=5 // pred_region
        // Predicated region
        $region17: #{tpu_custom_call.1} parent=15 // pred_check
          %p157 = pneg %p52
        $region18: #{tpu_custom_call.1} parent=15 // pred_check_branch
          %159 = sbr.rel (%p157) target = $region20
        $region19: #{tpu_custom_call.1} parent=15 // pred_region
          %s160 = sand.u32 %s42, 1
          %s161 = scalar_lea.sflag [#allocation3], %s160
          %s162 = sand.u32 %s42, 1
          %s163 = smul.addr %s162, 16
          %s164 = scalar_lea.vmem [#allocation2], %s163
          %s165 = smul.u32 2, %s26
          %s167 = ssub.s32 256, 256
          %168 = vsyncadd %s161, %s167
          %s169 = smul.addr %s25, 2
          %s170 = sadd.s32 %s165, %s169
          %s171 = smul.addr %s170, 128
          %s172 = scalar_lea.hbm %s0, %s171
          %s173 = sshll.u32 %s164, 4
          %s174 = int_to_ptr.vmem [resolvable:$true] %s173
          %179 = dma.hbm_to_vmem [thread:$0]  %s172, 256, %s174, %s161, 128, 128, 8
        $region20: #{tpu_custom_call.1} parent=15 // pred_fallthru
          _
        // Predicated region
        $region21: #{tpu_custom_call.1} parent=15 // pred_check
          %p180 = pneg %p78
        $region22: #{tpu_custom_call.1} parent=15 // pred_check_branch
          %182 = sbr.rel (%p180) target = $region24
        $region23: #{tpu_custom_call.1} parent=15 // pred_region
          %s183 = sand.u32 %s18, 1
          %s184 = scalar_lea.sflag [#allocation6], %s183
          %s185 = sand.u32 %s68, 1
          %s186 = smul.addr %s185, 16
          %s187 = scalar_lea.vmem [#allocation5], %s186
          %s189 = ssub.s32 256, 256
          %190 = vsyncadd %s184, %s189
          %s191 = smul.addr %s25, 2
          %s192 = smul.addr %s191, 128
          %s193 = scalar_lea.hbm %s1, %s192
          %s194 = sshll.u32 %s187, 4
          %s195 = int_to_ptr.vmem [resolvable:$true] %s194
          %200 = dma.hbm_to_vmem [thread:$0]  %s193, 256, %s195, %s184, 128, 128, 8
        $region24: #{tpu_custom_call.1} parent=15 // pred_fallthru
          _
        // Predicated region
        $region25: #{tpu_custom_call.1} parent=15 // pred_check
          %p201 = pneg %p104
        $region26: #{tpu_custom_call.1} parent=15 // pred_check_branch
          %203 = sbr.rel (%p201) target = $region28
        $region27: #{tpu_custom_call.1} parent=15 // pred_region
          %s204 = sand.u32 %s18, 1
          %s205 = scalar_lea.sflag [#allocation6], %s204
          %s206 = sand.u32 %s94, 1
          %s207 = smul.addr %s206, 16
          %s208 = scalar_lea.vmem [#allocation7], %s207
          %s210 = ssub.s32 256, 256
          %211 = vsyncadd %s205, %s210
          %s212 = smul.addr %s25, 2
          %s213 = smul.addr %s212, 128
          %s214 = scalar_lea.hbm %s2, %s213
          %s215 = sshll.u32 %s208, 4
          %s216 = int_to_ptr.vmem [resolvable:$true] %s215
          %221 = dma.hbm_to_vmem [thread:$0]  %s214, 256, %s216, %s205, 128, 128, 8
        $region28: #{tpu_custom_call.1} parent=15 // pred_fallthru
          _
      $region16: #{tpu_custom_call.1} parent=5 // pred_fallthru
        _
      %p222 = scmp.le.s32.totalorder 1, %s18
      %p223 = scmp.lt.s32.totalorder %s18, 3
      %p224 = pnand %p222, %p223
      %p225 = pneg %p224
      // Predicated region
      $region29: #{tpu_custom_call.1} parent=5 // pred_check
        _
      $region30: #{tpu_custom_call.1} parent=5 // pred_check_branch
        %227 = sbr.rel (%p224) target = $region32
      $region31: #{tpu_custom_call.1} parent=5 // pred_region
        %s228 = ssub.s32 %s18, 1
        %s229 = sand.u32 %s45, 1
        %s230 = scalar_lea.sflag [#allocation3], %s229
        %s231 = sand.u32 %s45, 1
        %s232 = smul.addr %s231, 16
        %s233 = scalar_lea.vmem [#allocation2], %s232
        // Predicated region
        $region33: #{tpu_custom_call.1} parent=31 // pred_check
          %p234 = pneg %p58
        $region34: #{tpu_custom_call.1} parent=31 // pred_check_branch
          %236 = sbr.rel (%p234) target = $region36
        $region35: #{tpu_custom_call.1} parent=31 // pred_region
          %237 = dma.done %s230, 256
        $region36: #{tpu_custom_call.1} parent=31 // pred_fallthru
          _
        %s238 = sand.u32 %s23, 1
        %s239 = scalar_lea.sflag [#allocation6], %s238
        %s240 = sand.u32 %s71, 1
        %s241 = smul.addr %s240, 16
        %s242 = scalar_lea.vmem [#allocation5], %s241
        // Predicated region
        $region37: #{tpu_custom_call.1} parent=31 // pred_check
          %p243 = pneg %p84
        $region38: #{tpu_custom_call.1} parent=31 // pred_check_branch
          %245 = sbr.rel (%p243) target = $region40
        $region39: #{tpu_custom_call.1} parent=31 // pred_region
          %246 = dma.done %s239, 256
        $region40: #{tpu_custom_call.1} parent=31 // pred_fallthru
          _
        %s247 = sand.u32 %s23, 1
        %s248 = scalar_lea.sflag [#allocation6], %s247
        %s249 = sand.u32 %s97, 1
        %s250 = smul.addr %s249, 16
        %s251 = scalar_lea.vmem [#allocation7], %s250
        // Predicated region
        $region41: #{tpu_custom_call.1} parent=31 // pred_check
          %p252 = pneg %p110
        $region42: #{tpu_custom_call.1} parent=31 // pred_check_branch
          %254 = sbr.rel (%p252) target = $region44
        $region43: #{tpu_custom_call.1} parent=31 // pred_region
          %255 = dma.done %s248, 256
        $region44: #{tpu_custom_call.1} parent=31 // pred_fallthru
          _
        %s256 = sand.u32 %s45, 1
        %s257 = scalar_lea.sflag [#allocation3], %s256
        %s258 = sand.u32 %s45, 1
        %s259 = smul.addr %s258, 16
        %s260 = scalar_lea.vmem [#allocation2], %s259
        %p261 = pneg %p58
        %p262 = pneg %p55
        %s263 = sand.u32 %s23, 1
        %s264 = scalar_lea.sflag [#allocation6], %s263
        %s265 = sand.u32 %s71, 1
        %s266 = smul.addr %s265, 16
        %s267 = scalar_lea.vmem [#allocation5], %s266
        %p268 = pneg %p84
        %p269 = pneg %p81
        %s270 = sand.u32 %s23, 1
        %s271 = scalar_lea.sflag [#allocation6], %s270
        %s272 = sand.u32 %s97, 1
        %s273 = smul.addr %s272, 16
        %s274 = scalar_lea.vmem [#allocation7], %s273
        %p275 = pneg %p110
        %p276 = pneg %p107
        %p277 = pneg %p138
        %p278 = pneg %p135
        %s279 = sand.u32 %s125, 1
        %s280 = scalar_lea.sflag [#allocation4], %s279
        %s281 = sand.u32 %s125, 1
        %s282 = smul.addr %s281, 16
        %s283 = scalar_lea.vmem [#allocation8], %s282
        %s284 = smul.u32 2, %s28
        %s285 = smul.u32 2, %s28
        %v286 = vld [vmem:[%s233] sm:$0xff]
        %v287 = vld [vmem:[%s233 + $0x8] sm:$0xff]
        %v288 = vld [vmem:[%s242] sm:$0xff]
        %v289 = vld [vmem:[%s242 + $0x8] sm:$0xff]
        %v290 = vld [vmem:[%s251] sm:$0xff]
        %v291 = vld [vmem:[%s251 + $0x8] sm:$0xff]
        %v292 = vmul.f32 %v286, 0.17677669
        %v293 = vmul.f32 %v287, 0.17677669
        %vm294 = vcmask 261120
        %v296 = vsel %vm294, %v292, 0
        %v299 = vsel %vm294, %v293, 0
        %v302 = vsel %vm294, %v288, 0
        %v305 = vsel %vm294, %v289, 0
        %307 = vmatprep.subr.mxu0 0.0
        %308 = vmatpush1.xpose.msra.mxu0 0.0
        %309 = vmatprep.subr.mxu0 0.0
        %310 = vmatpush1.xpose.msra.mxu0 0.0
        %311 = vmatprep.subr.mxu0 0.0
        %312 = vmatpush1.xpose.msra.mxu0 0.0
        %313 = vmatprep.subr.mxu0 0.0
        %314 = vmatpush1.xpose.msra.mxu0 0.0
        %315 = vmatprep.subr.mxu0 0.0
        %316 = vmatpush1.xpose.msra.mxu0 0.0
        %317 = vmatprep.subr.mxu0 0.0
        %318 = vmatpush1.xpose.msra.mxu0 0.0
        %319 = vmatprep.subr.mxu0 0.0
        %320 = vmatpush1.xpose.msra.mxu0 0.0
        %321 = vmatprep.subr.mxu0 0.0
        %322 = vmatpush1.xpose.msra.mxu0 0.0
        %323 = vmatprep.subr.mxu0 0.0
        %324 = vmatpush1.xpose.msra.mxu0 0.0
        %325 = vmatprep.subr.mxu0 0.0
        %326 = vmatpush1.xpose.msra.mxu0 0.0
        %327 = vmatprep.subr.mxu0 0.0
        %328 = vmatpush1.xpose.msra.mxu0 0.0
        %329 = vmatprep.subr.mxu0 0.0
        %330 = vmatpush1.xpose.msra.mxu0 0.0
        %331 = vmatprep.subr.mxu0 0.0
        %332 = vmatpush1.xpose.msra.mxu0 0.0
        %333 = vmatprep.subr.mxu0 0.0
        %334 = vmatpush1.xpose.msra.mxu0 0.0
        %335 = vmatprep.subr.mxu0 0.0
        %336 = vmatpush1.xpose.msra.mxu0 %v305
        %337 = vmatprep.subr.mxu0 0.0
        %338 = vmatpush1.xpose.msra.mxu0 %v302
        %339 = vmatprep.subr.mxu0 0.0
        %340 = vmatpush2.xpose.msra.mxu0 0.0
        %341 = vmatprep.subr.mxu0 0.0
        %342 = vmatpush2.xpose.msra.mxu0 0.0
        %343 = vmatprep.subr.mxu0 0.0
        %344 = vmatpush2.xpose.msra.mxu0 0.0
        %345 = vmatprep.subr.mxu0 0.0
        %346 = vmatpush2.xpose.msra.mxu0 0.0
        %347 = vmatprep.subr.mxu0 0.0
        %348 = vmatpush2.xpose.msra.mxu0 0.0
        %349 = vmatprep.subr.mxu0 0.0
        %350 = vmatpush2.xpose.msra.mxu0 0.0
        %351 = vmatprep.subr.mxu0 0.0
        %352 = vmatpush2.xpose.msra.mxu0 0.0
        %353 = vmatprep.subr.mxu0 0.0
        %354 = vmatpush2.xpose.msra.mxu0 0.0
        %355 = vmatprep.subr.mxu0 0.0
        %356 = vmatpush2.xpose.msra.mxu0 0.0
        %357 = vmatprep.subr.mxu0 0.0
        %358 = vmatpush2.xpose.msra.mxu0 0.0
        %359 = vmatprep.subr.mxu0 0.0
        %360 = vmatpush2.xpose.msra.mxu0 0.0
        %361 = vmatprep.subr.mxu0 0.0
        %362 = vmatpush2.xpose.msra.mxu0 0.0
        %363 = vmatprep.subr.mxu0 0.0
        %364 = vmatpush2.xpose.msra.mxu0 0.0
        %365 = vmatprep.subr.mxu0 0.0
        %366 = vmatpush2.xpose.msra.mxu0 0.0
        %367 = vmatprep.subr.mxu0 0.0
        %368 = vmatpush2.xpose.msra.mxu0 0.0
        %369 = vmatprep.subr.mxu0 0.0
        %370 = vmatpush2.xpose.msra.mxu0 0.0
        %371 = vmatprep.mubr.f32.mxu0 0.0
        %372 = vmatmul.mubr.f32.gmra.mxu0 %v296
        %v373 = vpop.f32.mrf.mxu0
        %v374 = vadd.f32 0.0, %v373
        %v375 = vpop.f32.mrf.mxu0
        %376 = vmatprep.mubr.f32.mxu0 0.0
        %377 = vmatmul.mubr.f32.gmra.mxu0 %v299
        %v378 = vpop.f32.mrf.mxu0
        %v379 = vadd.f32 0.0, %v378
        %v380 = vpop.f32.mrf.mxu0
        %381 = vdwg.mxu0
        %vm382 = vcmask 130048
        %v383 = vsel %vm382, %v374, -inf
        %384 = vmax.xlane.f32.xlu0 %v383
        %v385 = vpop.xlane.xlu0 %384
        %v386 = vsel %vm382, %v379, -inf
        %387 = vmax.xlane.f32.xlu0 %v386
        %v388 = vpop.xlane.xlu0 %387
        %v389 = vsub.f32 %v374, %v385
        %v390 = vsub.f32 %v379, %v388
        %v391 = vmul.f32 %v389, 1.442695
        %v392 = vpow.pop %v391
        %v393 = vmul.f32 %v390, 1.442695
        %v394 = vpow.pop %v393
        %v395 = vsel %vm382, %v392, 0.0
        %396 = vadd.xlane.f32.xlu0 %v395
        %v397 = vpop.xlane.xlu0 %396
        %v398 = vsel %vm382, %v394, 0.0
        %399 = vadd.xlane.f32.xlu0 %v398
        %v400 = vpop.xlane.xlu0 %399
        %v401 = vrcp.pop %v397
        %v402 = vrcp.pop %v400
        %v403 = vmul.f32 %v392, %v401
        %v404 = vmul.f32 %v394, %v402
        %v406 = vsel %vm382, %v403, 0
        %v409 = vsel %vm382, %v404, 0
        %411 = vmatprep.subr.mxu0 0.0
        %412 = vmatpush1.msra.mxu0 0.0
        %413 = vmatprep.subr.mxu0 0.0
        %414 = vmatpush1.msra.mxu0 0.0
        %415 = vmatprep.subr.mxu0 0.0
        %416 = vmatpush1.msra.mxu0 0.0
        %417 = vmatprep.subr.mxu0 0.0
        %418 = vmatpush1.msra.mxu0 0.0
        %419 = vmatprep.subr.mxu0 0.0
        %420 = vmatpush1.msra.mxu0 0.0
        %421 = vmatprep.subr.mxu0 0.0
        %422 = vmatpush1.msra.mxu0 0.0
        %423 = vmatprep.subr.mxu0 0.0
        %424 = vmatpush1.msra.mxu0 0.0
        %425 = vmatprep.subr.mxu0 0.0
        %426 = vmatpush1.msra.mxu0 0.0
        %427 = vmatprep.subr.mxu0 0.0
        %428 = vmatpush1.msra.mxu0 0.0
        %429 = vmatprep.subr.mxu0 0.0
        %430 = vmatpush1.msra.mxu0 0.0
        %431 = vmatprep.subr.mxu0 0.0
        %432 = vmatpush1.msra.mxu0 0.0
        %433 = vmatprep.subr.mxu0 0.0
        %434 = vmatpush1.msra.mxu0 0.0
        %435 = vmatprep.subr.mxu0 0.0
        %436 = vmatpush1.msra.mxu0 0.0
        %437 = vmatprep.subr.mxu0 0.0
        %438 = vmatpush1.msra.mxu0 0.0
        %439 = vmatprep.subr.mxu0 0.0
        %440 = vmatpush1.msra.mxu0 %v291
        %441 = vmatprep.subr.mxu0 0.0
        %442 = vmatpush1.msra.mxu0 %v290
        %443 = vmatprep.subr.mxu0 0.0
        %444 = vmatpush2.msra.mxu0 0.0
        %445 = vmatprep.subr.mxu0 0.0
        %446 = vmatpush2.msra.mxu0 0.0
        %447 = vmatprep.subr.mxu0 0.0
        %448 = vmatpush2.msra.mxu0 0.0
        %449 = vmatprep.subr.mxu0 0.0
        %450 = vmatpush2.msra.mxu0 0.0
        %451 = vmatprep.subr.mxu0 0.0
        %452 = vmatpush2.msra.mxu0 0.0
        %453 = vmatprep.subr.mxu0 0.0
        %454 = vmatpush2.msra.mxu0 0.0
        %455 = vmatprep.subr.mxu0 0.0
        %456 = vmatpush2.msra.mxu0 0.0
        %457 = vmatprep.subr.mxu0 0.0
        %458 = vmatpush2.msra.mxu0 0.0
        %459 = vmatprep.subr.mxu0 0.0
        %460 = vmatpush2.msra.mxu0 0.0
        %461 = vmatprep.subr.mxu0 0.0
        %462 = vmatpush2.msra.mxu0 0.0
        %463 = vmatprep.subr.mxu0 0.0
        %464 = vmatpush2.msra.mxu0 0.0
        %465 = vmatprep.subr.mxu0 0.0
        %466 = vmatpush2.msra.mxu0 0.0
        %467 = vmatprep.subr.mxu0 0.0
        %468 = vmatpush2.msra.mxu0 0.0
        %469 = vmatprep.subr.mxu0 0.0
        %470 = vmatpush2.msra.mxu0 0.0
        %471 = vmatprep.subr.mxu0 0.0
        %472 = vmatpush2.msra.mxu0 0.0
        %473 = vmatprep.subr.mxu0 0.0
        %474 = vmatpush2.msra.mxu0 0.0
        %475 = vmatprep.mubr.f32.mxu0 0.0
        %476 = vmatmul.mubr.f32.gmra.mxu0 %v406
        %v477 = vpop.f32.mrf.mxu0
        %v478 = vadd.f32 0.0, %v477
        %v479 = vpop.f32.mrf.mxu0
        %480 = vmatprep.mubr.f32.mxu0 0.0
        %481 = vmatmul.mubr.f32.gmra.mxu0 %v409
        %v482 = vpop.f32.mrf.mxu0
        %v483 = vadd.f32 0.0, %v482
        %v484 = vpop.f32.mrf.mxu0
        %485 = vdwg.mxu0
        %486 = vrot.lane.b32.xlu0 %v292, 96
        %v487 = vpop.permute.xlu0 %486
        %488 = vrot.lane.b32.xlu0 %v293, 96
        %v489 = vpop.permute.xlu0 %488
        %490 = vrot.lane.b32.xlu0 %v288, 96
        %v491 = vpop.permute.xlu0 %490
        %492 = vrot.lane.b32.xlu0 %v289, 96
        %v493 = vpop.permute.xlu0 %492
        %v494 = vsel %vm294, %v487, 0
        %v496 = vsel %vm294, %v489, 0
        %v498 = vsel %vm294, %v491, 0
        %v500 = vsel %vm294, %v493, 0
        %502 = vmatprep.subr.mxu0 0.0
        %503 = vmatpush1.xpose.msra.mxu0 0.0
        %504 = vmatprep.subr.mxu0 0.0
        %505 = vmatpush1.xpose.msra.mxu0 0.0
        %506 = vmatprep.subr.mxu0 0.0
        %507 = vmatpush1.xpose.msra.mxu0 0.0
        %508 = vmatprep.subr.mxu0 0.0
        %509 = vmatpush1.xpose.msra.mxu0 0.0
        %510 = vmatprep.subr.mxu0 0.0
        %511 = vmatpush1.xpose.msra.mxu0 0.0
        %512 = vmatprep.subr.mxu0 0.0
        %513 = vmatpush1.xpose.msra.mxu0 0.0
        %514 = vmatprep.subr.mxu0 0.0
        %515 = vmatpush1.xpose.msra.mxu0 0.0
        %516 = vmatprep.subr.mxu0 0.0
        %517 = vmatpush1.xpose.msra.mxu0 0.0
        %518 = vmatprep.subr.mxu0 0.0
        %519 = vmatpush1.xpose.msra.mxu0 0.0
        %520 = vmatprep.subr.mxu0 0.0
        %521 = vmatpush1.xpose.msra.mxu0 0.0
        %522 = vmatprep.subr.mxu0 0.0
        %523 = vmatpush1.xpose.msra.mxu0 0.0
        %524 = vmatprep.subr.mxu0 0.0
        %525 = vmatpush1.xpose.msra.mxu0 0.0
        %526 = vmatprep.subr.mxu0 0.0
        %527 = vmatpush1.xpose.msra.mxu0 0.0
        %528 = vmatprep.subr.mxu0 0.0
        %529 = vmatpush1.xpose.msra.mxu0 0.0
        %530 = vmatprep.subr.mxu0 0.0
        %531 = vmatpush1.xpose.msra.mxu0 %v500
        %532 = vmatprep.subr.mxu0 0.0
        %533 = vmatpush1.xpose.msra.mxu0 %v498
        %534 = vmatprep.subr.mxu0 0.0
        %535 = vmatpush2.xpose.msra.mxu0 0.0
        %536 = vmatprep.subr.mxu0 0.0
        %537 = vmatpush2.xpose.msra.mxu0 0.0
        %538 = vmatprep.subr.mxu0 0.0
        %539 = vmatpush2.xpose.msra.mxu0 0.0
        %540 = vmatprep.subr.mxu0 0.0
        %541 = vmatpush2.xpose.msra.mxu0 0.0
        %542 = vmatprep.subr.mxu0 0.0
        %543 = vmatpush2.xpose.msra.mxu0 0.0
        %544 = vmatprep.subr.mxu0 0.0
        %545 = vmatpush2.xpose.msra.mxu0 0.0
        %546 = vmatprep.subr.mxu0 0.0
        %547 = vmatpush2.xpose.msra.mxu0 0.0
        %548 = vmatprep.subr.mxu0 0.0
        %549 = vmatpush2.xpose.msra.mxu0 0.0
        %550 = vmatprep.subr.mxu0 0.0
        %551 = vmatpush2.xpose.msra.mxu0 0.0
        %552 = vmatprep.subr.mxu0 0.0
        %553 = vmatpush2.xpose.msra.mxu0 0.0
        %554 = vmatprep.subr.mxu0 0.0
        %555 = vmatpush2.xpose.msra.mxu0 0.0
        %556 = vmatprep.subr.mxu0 0.0
        %557 = vmatpush2.xpose.msra.mxu0 0.0
        %558 = vmatprep.subr.mxu0 0.0
        %559 = vmatpush2.xpose.msra.mxu0 0.0
        %560 = vmatprep.subr.mxu0 0.0
        %561 = vmatpush2.xpose.msra.mxu0 0.0
        %562 = vmatprep.subr.mxu0 0.0
        %563 = vmatpush2.xpose.msra.mxu0 0.0
        %564 = vmatprep.subr.mxu0 0.0
        %565 = vmatpush2.xpose.msra.mxu0 0.0
        %566 = vmatprep.mubr.f32.mxu0 0.0
        %567 = vmatmul.mubr.f32.gmra.mxu0 %v494
        %v568 = vpop.f32.mrf.mxu0
        %v569 = vadd.f32 0.0, %v568
        %v570 = vpop.f32.mrf.mxu0
        %571 = vmatprep.mubr.f32.mxu0 0.0
        %572 = vmatmul.mubr.f32.gmra.mxu0 %v496
        %v573 = vpop.f32.mrf.mxu0
        %v574 = vadd.f32 0.0, %v573
        %v575 = vpop.f32.mrf.mxu0
        %576 = vdwg.mxu0
        %v577 = vsel %vm382, %v569, -inf
        %578 = vmax.xlane.f32.xlu0 %v577
        %v579 = vpop.xlane.xlu0 %578
        %v580 = vsel %vm382, %v574, -inf
        %581 = vmax.xlane.f32.xlu0 %v580
        %v582 = vpop.xlane.xlu0 %581
        %v583 = vsub.f32 %v569, %v579
        %v584 = vsub.f32 %v574, %v582
        %v585 = vmul.f32 %v583, 1.442695
        %v586 = vpow.pop %v585
        %v587 = vmul.f32 %v584, 1.442695
        %v588 = vpow.pop %v587
        %v589 = vsel %vm382, %v586, 0.0
        %590 = vadd.xlane.f32.xlu0 %v589
        %v591 = vpop.xlane.xlu0 %590
        %v592 = vsel %vm382, %v588, 0.0
        %593 = vadd.xlane.f32.xlu0 %v592
        %v594 = vpop.xlane.xlu0 %593
        %v595 = vrcp.pop %v591
        %v596 = vrcp.pop %v594
        %v597 = vmul.f32 %v586, %v595
        %v598 = vmul.f32 %v588, %v596
        %601 = vrot.lane.b32.xlu0 %v290, 96
        %v602 = vpop.permute.xlu0 %601
        %603 = vrot.lane.b32.xlu0 %v291, 96
        %v604 = vpop.permute.xlu0 %603
        %v608 = vsel %vm382, %v597, 0
        %v611 = vsel %vm382, %v598, 0
        %613 = vmatprep.subr.mxu0 0.0
        %614 = vmatpush1.msra.mxu0 0.0
        %615 = vmatprep.subr.mxu0 0.0
        %616 = vmatpush1.msra.mxu0 0.0
        %617 = vmatprep.subr.mxu0 0.0
        %618 = vmatpush1.msra.mxu0 0.0
        %619 = vmatprep.subr.mxu0 0.0
        %620 = vmatpush1.msra.mxu0 0.0
        %621 = vmatprep.subr.mxu0 0.0
        %622 = vmatpush1.msra.mxu0 0.0
        %623 = vmatprep.subr.mxu0 0.0
        %624 = vmatpush1.msra.mxu0 0.0
        %625 = vmatprep.subr.mxu0 0.0
        %626 = vmatpush1.msra.mxu0 0.0
        %627 = vmatprep.subr.mxu0 0.0
        %628 = vmatpush1.msra.mxu0 0.0
        %629 = vmatprep.subr.mxu0 0.0
        %630 = vmatpush1.msra.mxu0 0.0
        %631 = vmatprep.subr.mxu0 0.0
        %632 = vmatpush1.msra.mxu0 0.0
        %633 = vmatprep.subr.mxu0 0.0
        %634 = vmatpush1.msra.mxu0 0.0
        %635 = vmatprep.subr.mxu0 0.0
        %636 = vmatpush1.msra.mxu0 0.0
        %637 = vmatprep.subr.mxu0 0.0
        %638 = vmatpush1.msra.mxu0 0.0
        %639 = vmatprep.subr.mxu0 0.0
        %640 = vmatpush1.msra.mxu0 0.0
        %641 = vmatprep.subr.mxu0 0.0
        %642 = vmatpush1.msra.mxu0 %v604
        %643 = vmatprep.subr.mxu0 0.0
        %644 = vmatpush1.msra.mxu0 %v602
        %645 = vmatprep.subr.mxu0 0.0
        %646 = vmatpush2.msra.mxu0 0.0
        %647 = vmatprep.subr.mxu0 0.0
        %648 = vmatpush2.msra.mxu0 0.0
        %649 = vmatprep.subr.mxu0 0.0
        %650 = vmatpush2.msra.mxu0 0.0
        %651 = vmatprep.subr.mxu0 0.0
        %652 = vmatpush2.msra.mxu0 0.0
        %653 = vmatprep.subr.mxu0 0.0
        %654 = vmatpush2.msra.mxu0 0.0
        %655 = vmatprep.subr.mxu0 0.0
        %656 = vmatpush2.msra.mxu0 0.0
        %657 = vmatprep.subr.mxu0 0.0
        %658 = vmatpush2.msra.mxu0 0.0
        %659 = vmatprep.subr.mxu0 0.0
        %660 = vmatpush2.msra.mxu0 0.0
        %661 = vmatprep.subr.mxu0 0.0
        %662 = vmatpush2.msra.mxu0 0.0
        %663 = vmatprep.subr.mxu0 0.0
        %664 = vmatpush2.msra.mxu0 0.0
        %665 = vmatprep.subr.mxu0 0.0
        %666 = vmatpush2.msra.mxu0 0.0
        %667 = vmatprep.subr.mxu0 0.0
        %668 = vmatpush2.msra.mxu0 0.0
        %669 = vmatprep.subr.mxu0 0.0
        %670 = vmatpush2.msra.mxu0 0.0
        %671 = vmatprep.subr.mxu0 0.0
        %672 = vmatpush2.msra.mxu0 0.0
        %673 = vmatprep.subr.mxu0 0.0
        %674 = vmatpush2.msra.mxu0 0.0
        %675 = vmatprep.subr.mxu0 0.0
        %676 = vmatpush2.msra.mxu0 0.0
        %677 = vmatprep.mubr.f32.mxu0 0.0
        %678 = vmatmul.mubr.f32.gmra.mxu0 %v608
        %v679 = vpop.f32.mrf.mxu0
        %v680 = vadd.f32 0.0, %v679
        %v681 = vpop.f32.mrf.mxu0
        %682 = vmatprep.mubr.f32.mxu0 0.0
        %683 = vmatmul.mubr.f32.gmra.mxu0 %v611
        %v684 = vpop.f32.mrf.mxu0
        %v685 = vadd.f32 0.0, %v684
        %v686 = vpop.f32.mrf.mxu0
        %687 = vdwg.mxu0
        %688 = vrot.lane.b32.xlu0 %v292, 64
        %v689 = vpop.permute.xlu0 %688
        %690 = vrot.lane.b32.xlu0 %v293, 64
        %v691 = vpop.permute.xlu0 %690
        %692 = vrot.lane.b32.xlu0 %v288, 64
        %v693 = vpop.permute.xlu0 %692
        %694 = vrot.lane.b32.xlu0 %v289, 64
        %v695 = vpop.permute.xlu0 %694
        %v696 = vsel %vm294, %v689, 0
        %v698 = vsel %vm294, %v691, 0
        %v700 = vsel %vm294, %v693, 0
        %v702 = vsel %vm294, %v695, 0
        %704 = vmatprep.subr.mxu0 0.0
        %705 = vmatpush1.xpose.msra.mxu0 0.0
        %706 = vmatprep.subr.mxu0 0.0
        %707 = vmatpush1.xpose.msra.mxu0 0.0
        %708 = vmatprep.subr.mxu0 0.0
        %709 = vmatpush1.xpose.msra.mxu0 0.0
        %710 = vmatprep.subr.mxu0 0.0
        %711 = vmatpush1.xpose.msra.mxu0 0.0
        %712 = vmatprep.subr.mxu0 0.0
        %713 = vmatpush1.xpose.msra.mxu0 0.0
        %714 = vmatprep.subr.mxu0 0.0
        %715 = vmatpush1.xpose.msra.mxu0 0.0
        %716 = vmatprep.subr.mxu0 0.0
        %717 = vmatpush1.xpose.msra.mxu0 0.0
        %718 = vmatprep.subr.mxu0 0.0
        %719 = vmatpush1.xpose.msra.mxu0 0.0
        %720 = vmatprep.subr.mxu0 0.0
        %721 = vmatpush1.xpose.msra.mxu0 0.0
        %722 = vmatprep.subr.mxu0 0.0
        %723 = vmatpush1.xpose.msra.mxu0 0.0
        %724 = vmatprep.subr.mxu0 0.0
        %725 = vmatpush1.xpose.msra.mxu0 0.0
        %726 = vmatprep.subr.mxu0 0.0
        %727 = vmatpush1.xpose.msra.mxu0 0.0
        %728 = vmatprep.subr.mxu0 0.0
        %729 = vmatpush1.xpose.msra.mxu0 0.0
        %730 = vmatprep.subr.mxu0 0.0
        %731 = vmatpush1.xpose.msra.mxu0 0.0
        %732 = vmatprep.subr.mxu0 0.0
        %733 = vmatpush1.xpose.msra.mxu0 %v702
        %734 = vmatprep.subr.mxu0 0.0
        %735 = vmatpush1.xpose.msra.mxu0 %v700
        %736 = vmatprep.subr.mxu0 0.0
        %737 = vmatpush2.xpose.msra.mxu0 0.0
        %738 = vmatprep.subr.mxu0 0.0
        %739 = vmatpush2.xpose.msra.mxu0 0.0
        %740 = vmatprep.subr.mxu0 0.0
        %741 = vmatpush2.xpose.msra.mxu0 0.0
        %742 = vmatprep.subr.mxu0 0.0
        %743 = vmatpush2.xpose.msra.mxu0 0.0
        %744 = vmatprep.subr.mxu0 0.0
        %745 = vmatpush2.xpose.msra.mxu0 0.0
        %746 = vmatprep.subr.mxu0 0.0
        %747 = vmatpush2.xpose.msra.mxu0 0.0
        %748 = vmatprep.subr.mxu0 0.0
        %749 = vmatpush2.xpose.msra.mxu0 0.0
        %750 = vmatprep.subr.mxu0 0.0
        %751 = vmatpush2.xpose.msra.mxu0 0.0
        %752 = vmatprep.subr.mxu0 0.0
        %753 = vmatpush2.xpose.msra.mxu0 0.0
        %754 = vmatprep.subr.mxu0 0.0
        %755 = vmatpush2.xpose.msra.mxu0 0.0
        %756 = vmatprep.subr.mxu0 0.0
        %757 = vmatpush2.xpose.msra.mxu0 0.0
        %758 = vmatprep.subr.mxu0 0.0
        %759 = vmatpush2.xpose.msra.mxu0 0.0
        %760 = vmatprep.subr.mxu0 0.0
        %761 = vmatpush2.xpose.msra.mxu0 0.0
        %762 = vmatprep.subr.mxu0 0.0
        %763 = vmatpush2.xpose.msra.mxu0 0.0
        %764 = vmatprep.subr.mxu0 0.0
        %765 = vmatpush2.xpose.msra.mxu0 0.0
        %766 = vmatprep.subr.mxu0 0.0
        %767 = vmatpush2.xpose.msra.mxu0 0.0
        %768 = vmatprep.mubr.f32.mxu0 0.0
        %769 = vmatmul.mubr.f32.gmra.mxu0 %v696
        %v770 = vpop.f32.mrf.mxu0
        %v771 = vadd.f32 0.0, %v770
        %v772 = vpop.f32.mrf.mxu0
        %773 = vmatprep.mubr.f32.mxu0 0.0
        %774 = vmatmul.mubr.f32.gmra.mxu0 %v698
        %v775 = vpop.f32.mrf.mxu0
        %v776 = vadd.f32 0.0, %v775
        %v777 = vpop.f32.mrf.mxu0
        %778 = vdwg.mxu0
        %v779 = vsel %vm382, %v771, -inf
        %780 = vmax.xlane.f32.xlu0 %v779
        %v781 = vpop.xlane.xlu0 %780
        %v782 = vsel %vm382, %v776, -inf
        %783 = vmax.xlane.f32.xlu0 %v782
        %v784 = vpop.xlane.xlu0 %783
        %v785 = vsub.f32 %v771, %v781
        %v786 = vsub.f32 %v776, %v784
        %v787 = vmul.f32 %v785, 1.442695
        %v788 = vpow.pop %v787
        %v789 = vmul.f32 %v786, 1.442695
        %v790 = vpow.pop %v789
        %v791 = vsel %vm382, %v788, 0.0
        %792 = vadd.xlane.f32.xlu0 %v791
        %v793 = vpop.xlane.xlu0 %792
        %v794 = vsel %vm382, %v790, 0.0
        %795 = vadd.xlane.f32.xlu0 %v794
        %v796 = vpop.xlane.xlu0 %795
        %v797 = vrcp.pop %v793
        %v798 = vrcp.pop %v796
        %v799 = vmul.f32 %v788, %v797
        %v800 = vmul.f32 %v790, %v798
        %801 = vrot.lane.b32.xlu0 %v290, 64
        %v802 = vpop.permute.xlu0 %801
        %803 = vrot.lane.b32.xlu0 %v291, 64
        %v804 = vpop.permute.xlu0 %803
        %v808 = vsel %vm382, %v799, 0
        %v811 = vsel %vm382, %v800, 0
        %813 = vmatprep.subr.mxu0 0.0
        %814 = vmatpush1.msra.mxu0 0.0
        %815 = vmatprep.subr.mxu0 0.0
        %816 = vmatpush1.msra.mxu0 0.0
        %817 = vmatprep.subr.mxu0 0.0
        %818 = vmatpush1.msra.mxu0 0.0
        %819 = vmatprep.subr.mxu0 0.0
        %820 = vmatpush1.msra.mxu0 0.0
        %821 = vmatprep.subr.mxu0 0.0
        %822 = vmatpush1.msra.mxu0 0.0
        %823 = vmatprep.subr.mxu0 0.0
        %824 = vmatpush1.msra.mxu0 0.0
        %825 = vmatprep.subr.mxu0 0.0
        %826 = vmatpush1.msra.mxu0 0.0
        %827 = vmatprep.subr.mxu0 0.0
        %828 = vmatpush1.msra.mxu0 0.0
        %829 = vmatprep.subr.mxu0 0.0
        %830 = vmatpush1.msra.mxu0 0.0
        %831 = vmatprep.subr.mxu0 0.0
        %832 = vmatpush1.msra.mxu0 0.0
        %833 = vmatprep.subr.mxu0 0.0
        %834 = vmatpush1.msra.mxu0 0.0
        %835 = vmatprep.subr.mxu0 0.0
        %836 = vmatpush1.msra.mxu0 0.0
        %837 = vmatprep.subr.mxu0 0.0
        %838 = vmatpush1.msra.mxu0 0.0
        %839 = vmatprep.subr.mxu0 0.0
        %840 = vmatpush1.msra.mxu0 0.0
        %841 = vmatprep.subr.mxu0 0.0
        %842 = vmatpush1.msra.mxu0 %v804
        %843 = vmatprep.subr.mxu0 0.0
        %844 = vmatpush1.msra.mxu0 %v802
        %845 = vmatprep.subr.mxu0 0.0
        %846 = vmatpush2.msra.mxu0 0.0
        %847 = vmatprep.subr.mxu0 0.0
        %848 = vmatpush2.msra.mxu0 0.0
        %849 = vmatprep.subr.mxu0 0.0
        %850 = vmatpush2.msra.mxu0 0.0
        %851 = vmatprep.subr.mxu0 0.0
        %852 = vmatpush2.msra.mxu0 0.0
        %853 = vmatprep.subr.mxu0 0.0
        %854 = vmatpush2.msra.mxu0 0.0
        %855 = vmatprep.subr.mxu0 0.0
        %856 = vmatpush2.msra.mxu0 0.0
        %857 = vmatprep.subr.mxu0 0.0
        %858 = vmatpush2.msra.mxu0 0.0
        %859 = vmatprep.subr.mxu0 0.0
        %860 = vmatpush2.msra.mxu0 0.0
        %861 = vmatprep.subr.mxu0 0.0
        %862 = vmatpush2.msra.mxu0 0.0
        %863 = vmatprep.subr.mxu0 0.0
        %864 = vmatpush2.msra.mxu0 0.0
        %865 = vmatprep.subr.mxu0 0.0
        %866 = vmatpush2.msra.mxu0 0.0
        %867 = vmatprep.subr.mxu0 0.0
        %868 = vmatpush2.msra.mxu0 0.0
        %869 = vmatprep.subr.mxu0 0.0
        %870 = vmatpush2.msra.mxu0 0.0
        %871 = vmatprep.subr.mxu0 0.0
        %872 = vmatpush2.msra.mxu0 0.0
        %873 = vmatprep.subr.mxu0 0.0
        %874 = vmatpush2.msra.mxu0 0.0
        %875 = vmatprep.subr.mxu0 0.0
        %876 = vmatpush2.msra.mxu0 0.0
        %877 = vmatprep.mubr.f32.mxu0 0.0
        %878 = vmatmul.mubr.f32.gmra.mxu0 %v808
        %v879 = vpop.f32.mrf.mxu0
        %v880 = vadd.f32 0.0, %v879
        %v881 = vpop.f32.mrf.mxu0
        %882 = vmatprep.mubr.f32.mxu0 0.0
        %883 = vmatmul.mubr.f32.gmra.mxu0 %v811
        %v884 = vpop.f32.mrf.mxu0
        %v885 = vadd.f32 0.0, %v884
        %v886 = vpop.f32.mrf.mxu0
        %887 = vdwg.mxu0
        %888 = vrot.lane.b32.xlu0 %v292, 32
        %v889 = vpop.permute.xlu0 %888
        %890 = vrot.lane.b32.xlu0 %v293, 32
        %v891 = vpop.permute.xlu0 %890
        %892 = vrot.lane.b32.xlu0 %v288, 32
        %v893 = vpop.permute.xlu0 %892
        %894 = vrot.lane.b32.xlu0 %v289, 32
        %v895 = vpop.permute.xlu0 %894
        %v896 = vsel %vm294, %v889, 0
        %v898 = vsel %vm294, %v891, 0
        %v900 = vsel %vm294, %v893, 0
        %v902 = vsel %vm294, %v895, 0
        %904 = vmatprep.subr.mxu0 0.0
        %905 = vmatpush1.xpose.msra.mxu0 0.0
        %906 = vmatprep.subr.mxu0 0.0
        %907 = vmatpush1.xpose.msra.mxu0 0.0
        %908 = vmatprep.subr.mxu0 0.0
        %909 = vmatpush1.xpose.msra.mxu0 0.0
        %910 = vmatprep.subr.mxu0 0.0
        %911 = vmatpush1.xpose.msra.mxu0 0.0
        %912 = vmatprep.subr.mxu0 0.0
        %913 = vmatpush1.xpose.msra.mxu0 0.0
        %914 = vmatprep.subr.mxu0 0.0
        %915 = vmatpush1.xpose.msra.mxu0 0.0
        %916 = vmatprep.subr.mxu0 0.0
        %917 = vmatpush1.xpose.msra.mxu0 0.0
        %918 = vmatprep.subr.mxu0 0.0
        %919 = vmatpush1.xpose.msra.mxu0 0.0
        %920 = vmatprep.subr.mxu0 0.0
        %921 = vmatpush1.xpose.msra.mxu0 0.0
        %922 = vmatprep.subr.mxu0 0.0
        %923 = vmatpush1.xpose.msra.mxu0 0.0
        %924 = vmatprep.subr.mxu0 0.0
        %925 = vmatpush1.xpose.msra.mxu0 0.0
        %926 = vmatprep.subr.mxu0 0.0
        %927 = vmatpush1.xpose.msra.mxu0 0.0
        %928 = vmatprep.subr.mxu0 0.0
        %929 = vmatpush1.xpose.msra.mxu0 0.0
        %930 = vmatprep.subr.mxu0 0.0
        %931 = vmatpush1.xpose.msra.mxu0 0.0
        %932 = vmatprep.subr.mxu0 0.0
        %933 = vmatpush1.xpose.msra.mxu0 %v902
        %934 = vmatprep.subr.mxu0 0.0
        %935 = vmatpush1.xpose.msra.mxu0 %v900
        %936 = vmatprep.subr.mxu0 0.0
        %937 = vmatpush2.xpose.msra.mxu0 0.0
        %938 = vmatprep.subr.mxu0 0.0
        %939 = vmatpush2.xpose.msra.mxu0 0.0
        %940 = vmatprep.subr.mxu0 0.0
        %941 = vmatpush2.xpose.msra.mxu0 0.0
        %942 = vmatprep.subr.mxu0 0.0
        %943 = vmatpush2.xpose.msra.mxu0 0.0
        %944 = vmatprep.subr.mxu0 0.0
        %945 = vmatpush2.xpose.msra.mxu0 0.0
        %946 = vmatprep.subr.mxu0 0.0
        %947 = vmatpush2.xpose.msra.mxu0 0.0
        %948 = vmatprep.subr.mxu0 0.0
        %949 = vmatpush2.xpose.msra.mxu0 0.0
        %950 = vmatprep.subr.mxu0 0.0
        %951 = vmatpush2.xpose.msra.mxu0 0.0
        %952 = vmatprep.subr.mxu0 0.0
        %953 = vmatpush2.xpose.msra.mxu0 0.0
        %954 = vmatprep.subr.mxu0 0.0
        %955 = vmatpush2.xpose.msra.mxu0 0.0
        %956 = vmatprep.subr.mxu0 0.0
        %957 = vmatpush2.xpose.msra.mxu0 0.0
        %958 = vmatprep.subr.mxu0 0.0
        %959 = vmatpush2.xpose.msra.mxu0 0.0
        %960 = vmatprep.subr.mxu0 0.0
        %961 = vmatpush2.xpose.msra.mxu0 0.0
        %962 = vmatprep.subr.mxu0 0.0
        %963 = vmatpush2.xpose.msra.mxu0 0.0
        %964 = vmatprep.subr.mxu0 0.0
        %965 = vmatpush2.xpose.msra.mxu0 0.0
        %966 = vmatprep.subr.mxu0 0.0
        %967 = vmatpush2.xpose.msra.mxu0 0.0
        %968 = vmatprep.mubr.f32.mxu0 0.0
        %969 = vmatmul.mubr.f32.gmra.mxu0 %v896
        %v970 = vpop.f32.mrf.mxu0
        %v971 = vadd.f32 0.0, %v970
        %v972 = vpop.f32.mrf.mxu0
        %973 = vmatprep.mubr.f32.mxu0 0.0
        %974 = vmatmul.mubr.f32.gmra.mxu0 %v898
        %v975 = vpop.f32.mrf.mxu0
        %v976 = vadd.f32 0.0, %v975
        %v977 = vpop.f32.mrf.mxu0
        %978 = vdwg.mxu0
        %v979 = vsel %vm382, %v971, -inf
        %980 = vmax.xlane.f32.xlu0 %v979
        %v981 = vpop.xlane.xlu0 %980
        %v982 = vsel %vm382, %v976, -inf
        %983 = vmax.xlane.f32.xlu0 %v982
        %v984 = vpop.xlane.xlu0 %983
        %v985 = vsub.f32 %v971, %v981
        %v986 = vsub.f32 %v976, %v984
        %v987 = vmul.f32 %v985, 1.442695
        %v988 = vpow.pop %v987
        %v989 = vmul.f32 %v986, 1.442695
        %v990 = vpow.pop %v989
        %v991 = vsel %vm382, %v988, 0.0
        %992 = vadd.xlane.f32.xlu0 %v991
        %v993 = vpop.xlane.xlu0 %992
        %v994 = vsel %vm382, %v990, 0.0
        %995 = vadd.xlane.f32.xlu0 %v994
        %v996 = vpop.xlane.xlu0 %995
        %v997 = vrcp.pop %v993
        %v998 = vrcp.pop %v996
        %v999 = vmul.f32 %v988, %v997
        %v1000 = vmul.f32 %v990, %v998
        %1001 = vrot.lane.b32.xlu0 %v290, 32
        %v1002 = vpop.permute.xlu0 %1001
        %1003 = vrot.lane.b32.xlu0 %v291, 32
        %v1004 = vpop.permute.xlu0 %1003
        %v1008 = vsel %vm382, %v999, 0
        %v1011 = vsel %vm382, %v1000, 0
        %1013 = vmatprep.subr.mxu0 0.0
        %1014 = vmatpush1.msra.mxu0 0.0
        %1015 = vmatprep.subr.mxu0 0.0
        %1016 = vmatpush1.msra.mxu0 0.0
        %1017 = vmatprep.subr.mxu0 0.0
        %1018 = vmatpush1.msra.mxu0 0.0
        %1019 = vmatprep.subr.mxu0 0.0
        %1020 = vmatpush1.msra.mxu0 0.0
        %1021 = vmatprep.subr.mxu0 0.0
        %1022 = vmatpush1.msra.mxu0 0.0
        %1023 = vmatprep.subr.mxu0 0.0
        %1024 = vmatpush1.msra.mxu0 0.0
        %1025 = vmatprep.subr.mxu0 0.0
        %1026 = vmatpush1.msra.mxu0 0.0
        %1027 = vmatprep.subr.mxu0 0.0
        %1028 = vmatpush1.msra.mxu0 0.0
        %1029 = vmatprep.subr.mxu0 0.0
        %1030 = vmatpush1.msra.mxu0 0.0
        %1031 = vmatprep.subr.mxu0 0.0
        %1032 = vmatpush1.msra.mxu0 0.0
        %1033 = vmatprep.subr.mxu0 0.0
        %1034 = vmatpush1.msra.mxu0 0.0
        %1035 = vmatprep.subr.mxu0 0.0
        %1036 = vmatpush1.msra.mxu0 0.0
        %1037 = vmatprep.subr.mxu0 0.0
        %1038 = vmatpush1.msra.mxu0 0.0
        %1039 = vmatprep.subr.mxu0 0.0
        %1040 = vmatpush1.msra.mxu0 0.0
        %1041 = vmatprep.subr.mxu0 0.0
        %1042 = vmatpush1.msra.mxu0 %v1004
        %1043 = vmatprep.subr.mxu0 0.0
        %1044 = vmatpush1.msra.mxu0 %v1002
        %1045 = vmatprep.subr.mxu0 0.0
        %1046 = vmatpush2.msra.mxu0 0.0
        %1047 = vmatprep.subr.mxu0 0.0
        %1048 = vmatpush2.msra.mxu0 0.0
        %1049 = vmatprep.subr.mxu0 0.0
        %1050 = vmatpush2.msra.mxu0 0.0
        %1051 = vmatprep.subr.mxu0 0.0
        %1052 = vmatpush2.msra.mxu0 0.0
        %1053 = vmatprep.subr.mxu0 0.0
        %1054 = vmatpush2.msra.mxu0 0.0
        %1055 = vmatprep.subr.mxu0 0.0
        %1056 = vmatpush2.msra.mxu0 0.0
        %1057 = vmatprep.subr.mxu0 0.0
        %1058 = vmatpush2.msra.mxu0 0.0
        %1059 = vmatprep.subr.mxu0 0.0
        %1060 = vmatpush2.msra.mxu0 0.0
        %1061 = vmatprep.subr.mxu0 0.0
        %1062 = vmatpush2.msra.mxu0 0.0
        %1063 = vmatprep.subr.mxu0 0.0
        %1064 = vmatpush2.msra.mxu0 0.0
        %1065 = vmatprep.subr.mxu0 0.0
        %1066 = vmatpush2.msra.mxu0 0.0
        %1067 = vmatprep.subr.mxu0 0.0
        %1068 = vmatpush2.msra.mxu0 0.0
        %1069 = vmatprep.subr.mxu0 0.0
        %1070 = vmatpush2.msra.mxu0 0.0
        %1071 = vmatprep.subr.mxu0 0.0
        %1072 = vmatpush2.msra.mxu0 0.0
        %1073 = vmatprep.subr.mxu0 0.0
        %1074 = vmatpush2.msra.mxu0 0.0
        %1075 = vmatprep.subr.mxu0 0.0
        %1076 = vmatpush2.msra.mxu0 0.0
        %1077 = vmatprep.mubr.f32.mxu0 0.0
        %1078 = vmatmul.mubr.f32.gmra.mxu0 %v1008
        %v1079 = vpop.f32.mrf.mxu0
        %v1080 = vadd.f32 0.0, %v1079
        %v1081 = vpop.f32.mrf.mxu0
        %1082 = vmatprep.mubr.f32.mxu0 0.0
        %1083 = vmatmul.mubr.f32.gmra.mxu0 %v1011
        %v1084 = vpop.f32.mrf.mxu0
        %v1085 = vadd.f32 0.0, %v1084
        %v1086 = vpop.f32.mrf.mxu0
        %1087 = vdwg.mxu0
        %1090 = vrot.lane.b32.xlu0 %v680, 32
        %v1091 = vpop.permute.xlu0 %1090
        %1092 = vrot.lane.b32.xlu0 %v685, 32
        %v1093 = vpop.permute.xlu0 %1092
        %1098 = vrot.lane.b32.xlu0 %v880, 64
        %v1099 = vpop.permute.xlu0 %1098
        %1100 = vrot.lane.b32.xlu0 %v885, 64
        %v1101 = vpop.permute.xlu0 %1100
        %1106 = vrot.lane.b32.xlu0 %v1080, 96
        %v1107 = vpop.permute.xlu0 %1106
        %1108 = vrot.lane.b32.xlu0 %v1085, 96
        %v1109 = vpop.permute.xlu0 %1108
        %v1112 = vsel %vm294, %v478, %v1091
        %v1113 = vsel %vm294, %v483, %v1093
        %vm1114 = vcmask 523264
        %v1115 = vsel %vm1114, %v1112, %v1099
        %v1116 = vsel %vm1114, %v1113, %v1101
        %vm1117 = vcmask 785408
        %v1118 = vsel %vm1117, %v1115, %v1107
        %v1119 = vsel %vm1117, %v1116, %v1109
        %1120 = vst [vmem:[%s283] sm:$0xff] %v1118
        %1121 = vst [vmem:[%s283 + $0x8] sm:$0xff] %v1119
        %s1122 = sand.u32 %s125, 1
        %s1123 = scalar_lea.sflag [#allocation4], %s1122
        %s1124 = sand.u32 %s125, 1
        %s1125 = smul.addr %s1124, 16
        %s1126 = scalar_lea.vmem [#allocation8], %s1125
        // Predicated region
        $region45: #{tpu_custom_call.1} parent=31 // pred_check
          %p1127 = pneg %p135
        $region46: #{tpu_custom_call.1} parent=31 // pred_check_branch
          %1129 = sbr.rel (%p1127) target = $region48
        $region47: #{tpu_custom_call.1} parent=31 // pred_region
          %s1130 = smul.u32 2, %s28
          %s1132 = ssub.s32 256, 256
          %1133 = vsyncadd %s1123, %s1132
          %s1134 = smul.addr %s27, 2
          %s1135 = sadd.s32 %s1130, %s1134
          %s1136 = smul.addr %s1135, 128
          %s1137 = scalar_lea.hbm %s3, %s1136
          %s1138 = sshll.u32 %s1126, 4
          %s1139 = int_to_ptr.vmem [resolvable:$true] %s1138
          %1144 = dma.vmem_to_hbm [thread:$0]  %s1139, 256, %s1137, %s1123, 128, 128, 8
        $region48: #{tpu_custom_call.1} parent=31 // pred_fallthru
          _
      $region32: #{tpu_custom_call.1} parent=5 // pred_fallthru
        _
      %p1145 = scmp.le.s32.totalorder 2, %s18
      // Predicated region
      $region49: #{tpu_custom_call.1} parent=5 // pred_check
        %p1146 = pneg %p1145
      $region50: #{tpu_custom_call.1} parent=5 // pred_check_branch
        %1148 = sbr.rel (%p1146) target = $region52
      $region51: #{tpu_custom_call.1} parent=5 // pred_region
        %s1149 = ssub.s32 %s18, 2
        // Predicated region
        $region53: #{tpu_custom_call.1} parent=51 // pred_check
          %p1150 = pneg %p141
        $region54: #{tpu_custom_call.1} parent=51 // pred_check_branch
          %1152 = sbr.rel (%p1150) target = $region56
        $region55: #{tpu_custom_call.1} parent=51 // pred_region
          %s1153 = sand.u32 %s126, 1
          %s1154 = scalar_lea.sflag [#allocation4], %s1153
          %s1155 = sand.u32 %s126, 1
          %s1156 = smul.addr %s1155, 16
          %s1157 = scalar_lea.vmem [#allocation8], %s1156
          %1158 = dma.done %s1154, 256
        $region56: #{tpu_custom_call.1} parent=51 // pred_fallthru
          _
      $region52: #{tpu_custom_call.1} parent=5 // pred_fallthru
        _
    $region6: #{tpu_custom_call.1} parent=1 // loop_footer
      %s22 = sadd.s32 1, %s18
    $region7: #{tpu_custom_call.1} parent=1 // loop_footer_branch
      %17 = sbr.rel target = $region3
    $region8: #{tpu_custom_call.1} parent=1 // loop_exit
      _
    %1159 = vsyncpa [#allocation3], 1
    %s1160 = scalar_lea.sflag [#allocation3], 1
    %1161 = vsyncpa %s1160, 1
    %1162 = vsyncpa [#allocation6], 1
    %s1163 = scalar_lea.sflag [#allocation6], 1
    %1164 = vsyncpa %s1163, 1
    %1165 = vsyncpa [#allocation4], 1
    %s1166 = scalar_lea.sflag [#allocation4], 1
    %1167 = vsyncpa %s1166, 1

</llo_original>
